<compile_context>
chip_gen: v6e
topology: v6e:2x2x1
jax: 0.10.0
libtpu: 0.0.40
codegen_flags: <defaults>
</compile_context>

<pallas_src>
import jax
import jax.numpy as jnp
from jax import lax
from jax.experimental import pallas as pl
from jax.experimental.pallas import tpu as pltpu

D_IN = 128
D_HID = 64
D_FEAT = 32
D_FEAT_PAD = 128     # feature columns padded to lane width (lane-dense, K=128 on MXU)
ROW_GRAN = 16        # row-tile granularity (safe sublane multiple for bf16 blocks)


def _round_up(x, m):
    return ((x + m - 1) // m) * m


def _cdiv(a, b):
    return (a + b - 1) // b


def _balanced_tile(n, t_max, gran):
    """Smallest tile (multiple of `gran`) covering n rows in ceil(n/t_max) tiles."""
    n = max(int(n), 1)
    n_tiles = _cdiv(n, t_max)
    return _round_up(_cdiv(n, n_tiles), gran)


# ----------------------------- kernels --------------------------------------

def mlp_feature_kernel(x_ref, w1_ref, b1_ref, w2_ref, b2_ref, o_ref):
    """One row-tile of the 128 -> 64 -> 32 ReLU MLP (output padded to 128 cols)."""
    h = jnp.maximum(
        jnp.dot(x_ref[...], w1_ref[...], preferred_element_type=jnp.float32)
        + b1_ref[...], 0.0)
    f = jnp.maximum(
        jnp.dot(h, w2_ref[...], preferred_element_type=jnp.float32)
        + b2_ref[...], 0.0)
    o_ref[...] = f.astype(o_ref.dtype)


def similarity_kernel(xf_ref, yf_ref, o_ref):
    """(TM, K) . (TN, K)^T without an in-kernel transpose: contract dim 1 of both."""
    acc = lax.dot_general(
        xf_ref[...], yf_ref[...],
        dimension_numbers=(((1,), (1,)), ((), ())),
        preferred_element_type=jnp.float32)
    o_ref[...] = acc.astype(o_ref.dtype)


# ----------------------------- wrappers --------------------------------------

def _mlp_features(x_padded, w1, b1, w2p, b2p, row_tile, feature_dtype):
    """Row-tiled feature extraction; weights stay VMEM-resident across the grid."""
    n_pad = x_padded.shape[0]
    const = lambda i: (0, 0)
    return pl.pallas_call(
        mlp_feature_kernel,
        out_shape=jax.ShapeDtypeStruct((n_pad, D_FEAT_PAD), feature_dtype),
        grid=(n_pad // row_tile,),
        in_specs=[
            pl.BlockSpec((row_tile, D_IN), lambda i: (i, 0)),
            pl.BlockSpec((D_IN, D_HID), const),
            pl.BlockSpec((1, D_HID), const),
            pl.BlockSpec((D_HID, D_FEAT_PAD), const),
            pl.BlockSpec((1, D_FEAT_PAD), const),
        ],
        out_specs=pl.BlockSpec((row_tile, D_FEAT_PAD), lambda i: (i, 0)),
        compiler_params=pltpu.CompilerParams(
            dimension_semantics=("parallel",)),
    )(x_padded, w1, b1, w2p, b2p)


def nimc_forward(X, Y, params, *, tm_max=512, tn_max=2048, mlp_row_tile=512,
                 feature_dtype=jnp.bfloat16, out_dtype=jnp.float32):
    Nx, Ny = X.shape[0], Y.shape[0]

    # Balanced, lane-dense output tiles: TM multiple of 16, TN multiple of 128.
    TM = _balanced_tile(Nx, tm_max, ROW_GRAN)
    TN = _balanced_tile(Ny, tn_max, 128)

    # v7x has 2 TensorCores: if the whole problem is a single tile, split one
    # "parallel" axis so both cores get work (no effect on 1-TC v5e/v6e).
    if Nx <= TM and Ny <= TN:
        if Nx > ROW_GRAN:
            TM = _balanced_tile(Nx, _round_up(_cdiv(Nx, 2), ROW_GRAN), ROW_GRAN)
        elif Ny > 128:
            TN = _balanced_tile(Ny, _round_up(_cdiv(Ny, 2), 128), 128)

    Nx_pad = _round_up(Nx, TM)
    Ny_pad = _round_up(Ny, TN)

    # Decoupled MLP row tiles: large fixed tile (amortizes per-step overhead),
    # independent of the similarity tiling.  The MLP-padded arrays may be a
    # little longer than Nx_pad/Ny_pad; the similarity grid only reads the
    # first Nx_pad/Ny_pad rows, which are always in bounds.
    rt_x = min(mlp_row_tile, Nx_pad)
    rt_y = min(mlp_row_tile, Ny_pad)
    Nx_mlp = _round_up(Nx_pad, rt_x)
    Ny_mlp = _round_up(Ny_pad, rt_y)

    Xp = jnp.pad(X, ((0, Nx_mlp - Nx), (0, 0)))
    Yp = jnp.pad(Y, ((0, Ny_mlp - Ny), (0, 0)))

    # Hoisted branch MLPs: computed once per row, not once per output tile.
    x_feat = _mlp_features(Xp, params["wx1"], params["bx1"],
                           params["wx2p"], params["bx2p"], rt_x, feature_dtype)
    y_feat = _mlp_features(Yp, params["wy1"], params["by1"],
                           params["wy2p"], params["by2p"], rt_y, feature_dtype)

    out = pl.pallas_call(
        similarity_kernel,
        out_shape=jax.ShapeDtypeStruct((Nx_pad, Ny_pad), out_dtype),
        grid=(Nx_pad // TM, Ny_pad // TN),
        in_specs=[
            pl.BlockSpec((TM, D_FEAT_PAD), lambda i, j: (i, 0)),
            pl.BlockSpec((TN, D_FEAT_PAD), lambda i, j: (j, 0)),
        ],
        out_specs=pl.BlockSpec((TM, TN), lambda i, j: (i, j)),
        compiler_params=pltpu.CompilerParams(
            dimension_semantics=("parallel", "parallel"),
            # Above v5e's 16 MiB default scoped limit, below v7x's 64 MiB
            # physical VMEM; actual live footprint at 512x2048 is ~9 MiB.
            vmem_limit_bytes=48 * 1024 * 1024),
    )(x_feat, y_feat)

    if Nx_pad == Nx and Ny_pad == Ny:
        return out          # avoid an unfused full read+write of the result
    return out[:Nx, :Ny]


# ----------------------------- params / reference ----------------------------

def init_params(key):
    # nn.Linear-equivalent params, stored transposed: W (in, out), b (1, out).
    # The 32->128 padded copies of layer-2 weights/biases are built once here
    # (padded feature columns are exactly zero, so the matmul is unchanged).
    ks = jax.random.split(key, 8)

    def lin(kw, kb, fan_in, fan_out):
        bound = 1.0 / jnp.sqrt(fan_in)
        w = jax.random.uniform(kw, (fan_in, fan_out), jnp.float32, -bound, bound)
        b = jax.random.uniform(kb, (1, fan_out), jnp.float32, -bound, bound)
        return w, b

    wx1, bx1 = lin(ks[0], ks[1], D_IN, D_HID)
    wx2, bx2 = lin(ks[2], ks[3], D_HID, D_FEAT)
    wy1, by1 = lin(ks[4], ks[5], D_IN, D_HID)
    wy2, by2 = lin(ks[6], ks[7], D_HID, D_FEAT)

    pad_cols = ((0, 0), (0, D_FEAT_PAD - D_FEAT))
    return dict(
        wx1=wx1, bx1=bx1, wx2=wx2, bx2=bx2,
        wy1=wy1, by1=by1, wy2=wy2, by2=by2,
        wx2p=jnp.pad(wx2, pad_cols), bx2p=jnp.pad(bx2, pad_cols),
        wy2p=jnp.pad(wy2, pad_cols), by2p=jnp.pad(by2, pad_cols))


def nimc_reference(X, Y, p):
    x1 = jax.nn.relu(X @ p["wx1"] + p["bx1"])
    x = jax.nn.relu(x1 @ p["wx2"] + p["bx2"])
    y1 = jax.nn.relu(Y @ p["wy1"] + p["by1"])
    y = jax.nn.relu(y1 @ p["wy2"] + p["by2"])
    return x @ y.T


if __name__ == "__main__":
    key = jax.random.PRNGKey(0)
    k_param, k_x, k_y = jax.random.split(key, 3)
    params = init_params(k_param)

    # Small case matching the module's natural shapes (128-d inputs).
    Nx, Ny, D = 8, 8, 128
    X = jax.random.normal(k_x, (Nx, D), jnp.float32)
    Y = jax.random.normal(k_y, (Ny, D), jnp.float32)
    ref = nimc_reference(X, Y, params)

    # Exact-semantics path (f32 features) -> tight tolerance.
    out_f32 = jax.block_until_ready(
        nimc_forward(X, Y, params, feature_dtype=jnp.float32))
    assert out_f32.shape == (Nx, Ny)
    assert jnp.allclose(out_f32, ref, atol=1e-4, rtol=1e-4)

    # Default (bf16 features, f32 accumulate/output) -> looser tolerance.
    out_bf = jax.block_until_ready(nimc_forward(X, Y, params))
    assert out_bf.shape == (Nx, Ny)
    assert jnp.allclose(out_bf, ref, atol=3e-2, rtol=3e-2)

    # Ragged, multi-tile case (exercises balanced tiling, 2D grid, edge padding).
    k_x2, k_y2 = jax.random.split(jax.random.PRNGKey(1), 2)
    X2 = jax.random.normal(k_x2, (260, D), jnp.float32)
    Y2 = jax.random.normal(k_y2, (300, D), jnp.float32)
    out2 = jax.block_until_ready(nimc_forward(X2, Y2, params))
    ref2 = nimc_reference(X2, Y2, params)
    assert out2.shape == (260, 300)
    assert jnp.allclose(out2, ref2, atol=3e-2, rtol=3e-2)

    print("KERNEL_OK")
</pallas_src>

<mosaic_0001>
module attributes {stable_mosaic.version = 11 : i64} {
  func.func @mlp_feature_kernel(%arg0: i32, %arg1: memref<16x128xf32, #tpu.memory_space<vmem>>, %arg2: memref<128x64xf32, #tpu.memory_space<vmem>>, %arg3: memref<1x64xf32, #tpu.memory_space<vmem>>, %arg4: memref<64x128xf32, #tpu.memory_space<vmem>>, %arg5: memref<1x128xf32, #tpu.memory_space<vmem>>, %arg6: memref<16x128xf32, #tpu.memory_space<vmem>>) attributes {dimension_semantics = [#tpu.dimension_semantics<parallel>], iteration_bounds = array<i64: 1>, scalar_prefetch = 0 : i64, scratch_operands = 0 : i64, tpu.core_type = #tpu.core_type<tc>, window_params = [{transform_indices = @transform_0, window_bounds = array<i64: 16, 128>}, {pipeline_mode = #tpu.pipeline_mode<synchronous>, transform_indices = @transform_1, window_bounds = array<i64: 128, 64>}, {pipeline_mode = #tpu.pipeline_mode<synchronous>, transform_indices = @transform_2, window_bounds = array<i64: 1, 64>}, {pipeline_mode = #tpu.pipeline_mode<synchronous>, transform_indices = @transform_3, window_bounds = array<i64: 64, 128>}, {pipeline_mode = #tpu.pipeline_mode<synchronous>, transform_indices = @transform_4, window_bounds = array<i64: 1, 128>}, {transform_indices = @transform_5, window_bounds = array<i64: 16, 128>}]} {
    %c0 = arith.constant 0 : index
    %c0_0 = arith.constant 0 : index
    %0 = vector.load %arg1[%c0, %c0_0] : memref<16x128xf32, #tpu.memory_space<vmem>>, vector<16x128xf32>
    %c0_1 = arith.constant 0 : index
    %c0_2 = arith.constant 0 : index
    %1 = vector.load %arg2[%c0_1, %c0_2] : memref<128x64xf32, #tpu.memory_space<vmem>>, vector<128x64xf32>
    %cst = arith.constant dense<0.000000e+00> : vector<16x64xf32>
    %2 = tpu.matmul %0, %1, %cst {dimension_numbers = #tpu.dot_dimension_numbers<[1], [0], [0], [1], [0, 0, 1, 1], [], []>} : vector<16x128xf32>, vector<128x64xf32>, vector<16x64xf32> -> vector<16x64xf32>
    %c0_3 = arith.constant 0 : index
    %c0_4 = arith.constant 0 : index
    %3 = vector.load %arg3[%c0_3, %c0_4] : memref<1x64xf32, #tpu.memory_space<vmem>>, vector<1x64xf32>
    %4 = vector.broadcast %3 : vector<1x64xf32> to vector<16x64xf32>
    %5 = arith.addf %2, %4 : vector<16x64xf32>
    %cst_5 = arith.constant 0.000000e+00 : f32
    %6 = vector.broadcast %cst_5 : f32 to vector<16x64xf32>
    %7 = arith.maximumf %5, %6 : vector<16x64xf32>
    %c0_6 = arith.constant 0 : index
    %c0_7 = arith.constant 0 : index
    %8 = vector.load %arg4[%c0_6, %c0_7] : memref<64x128xf32, #tpu.memory_space<vmem>>, vector<64x128xf32>
    %cst_8 = arith.constant dense<0.000000e+00> : vector<16x128xf32>
    %9 = tpu.matmul %7, %8, %cst_8 {dimension_numbers = #tpu.dot_dimension_numbers<[1], [0], [0], [1], [0, 0, 1, 1], [], []>} : vector<16x64xf32>, vector<64x128xf32>, vector<16x128xf32> -> vector<16x128xf32>
    %c0_9 = arith.constant 0 : index
    %c0_10 = arith.constant 0 : index
    %10 = vector.load %arg5[%c0_9, %c0_10] : memref<1x128xf32, #tpu.memory_space<vmem>>, vector<1x128xf32>
    %11 = vector.broadcast %10 : vector<1x128xf32> to vector<16x128xf32>
    %12 = arith.addf %9, %11 : vector<16x128xf32>
    %cst_11 = arith.constant 0.000000e+00 : f32
    %13 = vector.broadcast %cst_11 : f32 to vector<16x128xf32>
    %14 = arith.maximumf %12, %13 : vector<16x128xf32>
    %c0_12 = arith.constant 0 : index
    %c0_13 = arith.constant 0 : index
    %15 = vector.load %arg6[%c0_12, %c0_13] : memref<16x128xf32, #tpu.memory_space<vmem>>, vector<16x128xf32>
    tpu.vector_store %arg6[%c0_12, %c0_13], %14 {strides = array<i32>} : memref<16x128xf32, #tpu.memory_space<vmem>>, vector<16x128xf32>,
    return
  }
  func.func @transform_0(%arg0: i32) -> (i32, i32) {
    %c0_i32 = arith.constant 0 : i32
    %c0_i32_0 = arith.constant 0 : i32
    return %arg0, %c0_i32 : i32, i32
  }
  func.func @transform_1(%arg0: i32) -> (i32, i32) {
    %c0_i32 = arith.constant 0 : i32
    %c0_i32_0 = arith.constant 0 : i32
    %c0_i32_1 = arith.constant 0 : i32
    return %c0_i32, %c0_i32_0 : i32, i32
  }
  func.func @transform_2(%arg0: i32) -> (i32, i32) {
    %c0_i32 = arith.constant 0 : i32
    %c0_i32_0 = arith.constant 0 : i32
    %c0_i32_1 = arith.constant 0 : i32
    return %c0_i32, %c0_i32_0 : i32, i32
  }
  func.func @transform_3(%arg0: i32) -> (i32, i32) {
    %c0_i32 = arith.constant 0 : i32
    %c0_i32_0 = arith.constant 0 : i32
    %c0_i32_1 = arith.constant 0 : i32
    return %c0_i32, %c0_i32_0 : i32, i32
  }
  func.func @transform_4(%arg0: i32) -> (i32, i32) {
    %c0_i32 = arith.constant 0 : i32
    %c0_i32_0 = arith.constant 0 : i32
    %c0_i32_1 = arith.constant 0 : i32
    return %c0_i32, %c0_i32_0 : i32, i32
  }
  func.func @transform_5(%arg0: i32) -> (i32, i32) {
    %c0_i32 = arith.constant 0 : i32
    %c0_i32_0 = arith.constant 0 : i32
    return %arg0, %c0_i32 : i32, i32
  }
}

</mosaic_0001>

<llo_original>
// kernel: tpu_custom_call.1
$region0: #{tpu_custom_call.1}
  #allocation0 [shape = 'u32[]', space=smem, size = 0x4, offset = 0x4, fixed_abs, tag = 'smem constant byte address 0x4 - core index']
  #allocation1 [shape = 'u32[144,128]{1,0:T(1,128)}', space=vmem, size = 0x12000, scoped, tag = 'internal scratch']
  %s0 = inlined_call_operand.vmem [shape: f32[16,128], index: 0, kind: input, shape index: {}]
  %s1 = inlined_call_operand.vmem [shape: f32[128,64], index: 1, kind: input, shape index: {}]
  %s2 = inlined_call_operand.vmem [shape: f32[1,64], index: 2, kind: input, shape index: {}]
  %s3 = inlined_call_operand.vmem [shape: f32[64,128], index: 3, kind: input, shape index: {}]
  %s4 = inlined_call_operand.vmem [shape: f32[1,128], index: 4, kind: input, shape index: {}]
  %s5 = inlined_call_operand.hbm [shape: f32[16,128], index: 5, kind: output, shape index: {}]
  %s6 = sld [smem:[#allocation0]]
  $region30: #{tpu_custom_call.1} parent=0
    _
  %s8 = ssub.s32 1, %s6
  %s9 = scalar_select 0, %s8, %s6
  $region1: #{tpu_custom_call.1} parent=0
    #allocation2 [shape = 'u8[8192]{0}', space=vmem, size = 0x2000, scoped, tag = 'output window, operand 0, single buffered']
    #allocation3 [shape = 's32[1]{0}', space=sflag, size = 0x4, scoped, tag = 'scoped memory for tpu_custom_call.1']
    %10 = vsyncpa [#allocation3], 0
    // Predicated region
    $region2: #{tpu_custom_call.1} parent=1 // pred_check
      _
    $region3: #{tpu_custom_call.1} parent=1 // pred_check_branch
      %12 = sbr.rel (0) target = $region5
    $region4: #{tpu_custom_call.1} parent=1 // pred_region
      _
    $region5: #{tpu_custom_call.1} parent=1 // pred_fallthru
      _
    // Predicated region
    $region6: #{tpu_custom_call.1} parent=1 // pred_check
      _
    $region7: #{tpu_custom_call.1} parent=1 // pred_check_branch
      %14 = sbr.rel (0) target = $region9
    $region8: #{tpu_custom_call.1} parent=1 // pred_region
      _
    $region9: #{tpu_custom_call.1} parent=1 // pred_fallthru
      _
    // Predicated region
    $region10: #{tpu_custom_call.1} parent=1 // pred_check
      _
    $region11: #{tpu_custom_call.1} parent=1 // pred_check_branch
      %16 = sbr.rel (0) target = $region13
    $region12: #{tpu_custom_call.1} parent=1 // pred_region
      _
    $region13: #{tpu_custom_call.1} parent=1 // pred_fallthru
      _
    // Predicated region
    $region14: #{tpu_custom_call.1} parent=1 // pred_check
      _
    $region15: #{tpu_custom_call.1} parent=1 // pred_check_branch
      %18 = sbr.rel (0) target = $region17
    $region16: #{tpu_custom_call.1} parent=1 // pred_region
      _
    $region17: #{tpu_custom_call.1} parent=1 // pred_fallthru
      _
    // Predicated region
    $region18: #{tpu_custom_call.1} parent=1 // pred_check
      _
    $region19: #{tpu_custom_call.1} parent=1 // pred_check_branch
      %20 = sbr.rel (0) target = $region21
    $region20: #{tpu_custom_call.1} parent=1 // pred_region
      _
    $region21: #{tpu_custom_call.1} parent=1 // pred_fallthru
      _
    %v21 = vld [vmem:[%s0] sm:$0xff]
    %v22 = vld [vmem:[%s0 + $0x8] sm:$0xff]
    %v23 = vld [vmem:[%s1] sm:$0xff]
    %v24 = vld [vmem:[%s1 + $0x8] sm:$0xff]
    %v25 = vld [vmem:[%s1 + $0x10] sm:$0xff]
    %v26 = vld [vmem:[%s1 + $0x18] sm:$0xff]
    %v27 = vld [vmem:[%s1 + $0x20] sm:$0xff]
    %v28 = vld [vmem:[%s1 + $0x28] sm:$0xff]
    %v29 = vld [vmem:[%s1 + $0x30] sm:$0xff]
    %v30 = vld [vmem:[%s1 + $0x38] sm:$0xff]
    %v31 = vld [vmem:[%s1 + $0x40] sm:$0xff]
    %v32 = vld [vmem:[%s1 + $0x48] sm:$0xff]
    %v33 = vld [vmem:[%s1 + $0x50] sm:$0xff]
    %v34 = vld [vmem:[%s1 + $0x58] sm:$0xff]
    %v35 = vld [vmem:[%s1 + $0x60] sm:$0xff]
    %v36 = vld [vmem:[%s1 + $0x68] sm:$0xff]
    %v37 = vld [vmem:[%s1 + $0x70] sm:$0xff]
    %v38 = vld [vmem:[%s1 + $0x78] sm:$0xff]
    %v39 = vld [vmem:[%s2] sm:$0x1]
    %v41 = vlaneseq
    %v42 = vshrl.u32 %v41, 7
    %v43 = vsub.s32 0, %v42
    %v44 = vrot.slane %v39, %v43
    %46 = vmatprep.subr.mxu0 0.0
    %47 = vmatpush1.msra.mxu0 %v38
    %48 = vmatprep.subr.mxu0 0.0
    %49 = vmatpush1.msra.mxu0 %v37
    %50 = vmatprep.subr.mxu0 0.0
    %51 = vmatpush1.msra.mxu0 %v36
    %52 = vmatprep.subr.mxu0 0.0
    %53 = vmatpush1.msra.mxu0 %v35
    %54 = vmatprep.subr.mxu0 0.0
    %55 = vmatpush1.msra.mxu0 %v34
    %56 = vmatprep.subr.mxu0 0.0
    %57 = vmatpush1.msra.mxu0 %v33
    %58 = vmatprep.subr.mxu0 0.0
    %59 = vmatpush1.msra.mxu0 %v32
    %60 = vmatprep.subr.mxu0 0.0
    %61 = vmatpush1.msra.mxu0 %v31
    %62 = vmatprep.subr.mxu0 0.0
    %63 = vmatpush1.msra.mxu0 %v30
    %64 = vmatprep.subr.mxu0 0.0
    %65 = vmatpush1.msra.mxu0 %v29
    %66 = vmatprep.subr.mxu0 0.0
    %67 = vmatpush1.msra.mxu0 %v28
    %68 = vmatprep.subr.mxu0 0.0
    %69 = vmatpush1.msra.mxu0 %v27
    %70 = vmatprep.subr.mxu0 0.0
    %71 = vmatpush1.msra.mxu0 %v26
    %72 = vmatprep.subr.mxu0 0.0
    %73 = vmatpush1.msra.mxu0 %v25
    %74 = vmatprep.subr.mxu0 0.0
    %75 = vmatpush1.msra.mxu0 %v24
    %76 = vmatprep.subr.mxu0 0.0
    %77 = vmatpush1.msra.mxu0 %v23
    %78 = vmatprep.subr.mxu0 0.0
    %79 = vmatpush2.msra.mxu0 0.0
    %80 = vmatprep.subr.mxu0 0.0
    %81 = vmatpush2.msra.mxu0 0.0
    %82 = vmatprep.subr.mxu0 0.0
    %83 = vmatpush2.msra.mxu0 0.0
    %84 = vmatprep.subr.mxu0 0.0
    %85 = vmatpush2.msra.mxu0 0.0
    %86 = vmatprep.subr.mxu0 0.0
    %87 = vmatpush2.msra.mxu0 0.0
    %88 = vmatprep.subr.mxu0 0.0
    %89 = vmatpush2.msra.mxu0 0.0
    %90 = vmatprep.subr.mxu0 0.0
    %91 = vmatpush2.msra.mxu0 0.0
    %92 = vmatprep.subr.mxu0 0.0
    %93 = vmatpush2.msra.mxu0 0.0
    %94 = vmatprep.subr.mxu0 0.0
    %95 = vmatpush2.msra.mxu0 0.0
    %96 = vmatprep.subr.mxu0 0.0
    %97 = vmatpush2.msra.mxu0 0.0
    %98 = vmatprep.subr.mxu0 0.0
    %99 = vmatpush2.msra.mxu0 0.0
    %100 = vmatprep.subr.mxu0 0.0
    %101 = vmatpush2.msra.mxu0 0.0
    %102 = vmatprep.subr.mxu0 0.0
    %103 = vmatpush2.msra.mxu0 0.0
    %104 = vmatprep.subr.mxu0 0.0
    %105 = vmatpush2.msra.mxu0 0.0
    %106 = vmatprep.subr.mxu0 0.0
    %107 = vmatpush2.msra.mxu0 0.0
    %108 = vmatprep.subr.mxu0 0.0
    %109 = vmatpush2.msra.mxu0 0.0
    %110 = vmatprep.mubr.f32.mxu0 0.0
    %111 = vmatmul.mubr.f32.gmra.mxu0 %v21
    %v112 = vpop.f32.mrf.mxu0
    %v113 = vadd.f32 %v44, %v112
    %v114 = vpop.f32.mrf.mxu0
    %115 = vmatprep.mubr.f32.mxu0 0.0
    %116 = vmatmul.mubr.f32.gmra.mxu0 %v22
    %v117 = vpop.f32.mrf.mxu0
    %v118 = vadd.f32 %v44, %v117
    %v119 = vpop.f32.mrf.mxu0
    %120 = vdwg.mxu0
    %v121 = vmax.f32 %v113, 0.0
    %v122 = vmax.f32 %v118, 0.0
    %v123 = vld [vmem:[%s3] sm:$0xff]
    %v124 = vld [vmem:[%s3 + $0x8] sm:$0xff]
    %v125 = vld [vmem:[%s3 + $0x10] sm:$0xff]
    %v126 = vld [vmem:[%s3 + $0x18] sm:$0xff]
    %v127 = vld [vmem:[%s3 + $0x20] sm:$0xff]
    %v128 = vld [vmem:[%s3 + $0x28] sm:$0xff]
    %v129 = vld [vmem:[%s3 + $0x30] sm:$0xff]
    %v130 = vld [vmem:[%s3 + $0x38] sm:$0xff]
    %v131 = vld [vmem:[%s4] sm:$0x1]
    %v133 = vlaneseq
    %v134 = vshrl.u32 %v133, 7
    %v135 = vsub.s32 0, %v134
    %v136 = vrot.slane %v131, %v135
    %vm138 = vcmask 523264
    %v140 = vsel %vm138, %v121, 0
    %v143 = vsel %vm138, %v122, 0
    %145 = vmatprep.subr.mxu0 0.0
    %146 = vmatpush1.msra.mxu0 0.0
    %147 = vmatprep.subr.mxu0 0.0
    %148 = vmatpush1.msra.mxu0 0.0
    %149 = vmatprep.subr.mxu0 0.0
    %150 = vmatpush1.msra.mxu0 0.0
    %151 = vmatprep.subr.mxu0 0.0
    %152 = vmatpush1.msra.mxu0 0.0
    %153 = vmatprep.subr.mxu0 0.0
    %154 = vmatpush1.msra.mxu0 0.0
    %155 = vmatprep.subr.mxu0 0.0
    %156 = vmatpush1.msra.mxu0 0.0
    %157 = vmatprep.subr.mxu0 0.0
    %158 = vmatpush1.msra.mxu0 0.0
    %159 = vmatprep.subr.mxu0 0.0
    %160 = vmatpush1.msra.mxu0 0.0
    %161 = vmatprep.subr.mxu0 0.0
    %162 = vmatpush1.msra.mxu0 %v130
    %163 = vmatprep.subr.mxu0 0.0
    %164 = vmatpush1.msra.mxu0 %v129
    %165 = vmatprep.subr.mxu0 0.0
    %166 = vmatpush1.msra.mxu0 %v128
    %167 = vmatprep.subr.mxu0 0.0
    %168 = vmatpush1.msra.mxu0 %v127
    %169 = vmatprep.subr.mxu0 0.0
    %170 = vmatpush1.msra.mxu0 %v126
    %171 = vmatprep.subr.mxu0 0.0
    %172 = vmatpush1.msra.mxu0 %v125
    %173 = vmatprep.subr.mxu0 0.0
    %174 = vmatpush1.msra.mxu0 %v124
    %175 = vmatprep.subr.mxu0 0.0
    %176 = vmatpush1.msra.mxu0 %v123
    %177 = vmatprep.subr.mxu0 0.0
    %178 = vmatpush2.msra.mxu0 0.0
    %179 = vmatprep.subr.mxu0 0.0
    %180 = vmatpush2.msra.mxu0 0.0
    %181 = vmatprep.subr.mxu0 0.0
    %182 = vmatpush2.msra.mxu0 0.0
    %183 = vmatprep.subr.mxu0 0.0
    %184 = vmatpush2.msra.mxu0 0.0
    %185 = vmatprep.subr.mxu0 0.0
    %186 = vmatpush2.msra.mxu0 0.0
    %187 = vmatprep.subr.mxu0 0.0
    %188 = vmatpush2.msra.mxu0 0.0
    %189 = vmatprep.subr.mxu0 0.0
    %190 = vmatpush2.msra.mxu0 0.0
    %191 = vmatprep.subr.mxu0 0.0
    %192 = vmatpush2.msra.mxu0 0.0
    %193 = vmatprep.subr.mxu0 0.0
    %194 = vmatpush2.msra.mxu0 0.0
    %195 = vmatprep.subr.mxu0 0.0
    %196 = vmatpush2.msra.mxu0 0.0
    %197 = vmatprep.subr.mxu0 0.0
    %198 = vmatpush2.msra.mxu0 0.0
    %199 = vmatprep.subr.mxu0 0.0
    %200 = vmatpush2.msra.mxu0 0.0
    %201 = vmatprep.subr.mxu0 0.0
    %202 = vmatpush2.msra.mxu0 0.0
    %203 = vmatprep.subr.mxu0 0.0
    %204 = vmatpush2.msra.mxu0 0.0
    %205 = vmatprep.subr.mxu0 0.0
    %206 = vmatpush2.msra.mxu0 0.0
    %207 = vmatprep.subr.mxu0 0.0
    %208 = vmatpush2.msra.mxu0 0.0
    %209 = vmatprep.mubr.f32.mxu0 0.0
    %210 = vmatmul.mubr.f32.gmra.mxu0 %v140
    %v211 = vpop.f32.mrf.mxu0
    %v212 = vadd.f32 %v136, %v211
    %v213 = vpop.f32.mrf.mxu0
    %214 = vmatprep.mubr.f32.mxu0 0.0
    %215 = vmatmul.mubr.f32.gmra.mxu0 %v143
    %v216 = vpop.f32.mrf.mxu0
    %v217 = vadd.f32 %v136, %v216
    %v218 = vpop.f32.mrf.mxu0
    %219 = vdwg.mxu0
    %v220 = vmax.f32 %v212, 0.0
    %v221 = vmax.f32 %v217, 0.0
    %222 = vst [vmem:[#allocation2] sm:$0xff] %v220
    %223 = vst [vmem:[#allocation2 + $0x8] sm:$0xff] %v221
    // Predicated region
    $region22: #{tpu_custom_call.1} parent=1 // pred_check
      _
    $region23: #{tpu_custom_call.1} parent=1 // pred_check_branch
      %225 = sbr.rel (0) target = $region25
    $region24: #{tpu_custom_call.1} parent=1 // pred_region
      %s227 = ssub.s32 256, 256
      %228 = vsyncadd [#allocation3], %s227
      %s229 = sshll.u32 [#allocation2], 4
      %s230 = int_to_ptr.vmem [resolvable:$true] %s229
      %235 = dma.vmem_to_hbm [thread:$0]  %s230, 256, %s5, [#allocation3], 128, 128, 8
    $region25: #{tpu_custom_call.1} parent=1 // pred_fallthru
      _
    // Predicated region
    $region26: #{tpu_custom_call.1} parent=1 // pred_check
      _
    $region27: #{tpu_custom_call.1} parent=1 // pred_check_branch
      %237 = sbr.rel (0) target = $region29
    $region28: #{tpu_custom_call.1} parent=1 // pred_region
      %238 = dma.done [#allocation3], 256
    $region29: #{tpu_custom_call.1} parent=1 // pred_fallthru
      _
    %239 = vsyncpa [#allocation3], 1

</llo_original>
